<compile_context>
chip_gen: v7x
topology: tpu7x:2x2x1
jax: 0.10.0
libtpu: 0.0.40
codegen_flags: <defaults>
</compile_context>

<pallas_src>
import jax
import jax.numpy as jnp
from jax import lax
from jax.experimental import pallas as pl
from jax.experimental.pallas import tpu as pltpu


def _round_up(a: int, b: int) -> int:
    return ((a + b - 1) // b) * b


def _largest_divisor_leq(n: int, cap: int) -> int:
    cap = max(1, min(n, cap))
    for d in range(cap, 0, -1):
        if n % d == 0:
            return d
    return 1


def _per_batch_vmem_bytes(tm, tn, d, in_itemsize, out_itemsize):
    """Approx. VMEM bytes used per batch element of one grid step."""
    out_blk = tm * tn * out_itemsize * 2                 # double-buffered out tile
    interm = tm * tn * 4 * 2                             # f32 zz + one broadcast-add temp
    x_blk = tm * _round_up(d, 128) * in_itemsize * 2     # lane-padded, double-buffered
    y_blk = tn * _round_up(d, 128) * in_itemsize * 2
    rx_blk = tm * 128 * 4 * 2                            # (TM,1) lane-pads to 128
    ry_blk = 8 * tn * 4 * 2                              # (1,TN) sublane-pads to 8
    return out_blk + interm + x_blk + y_blk + rx_blk + ry_blk


def _pairwise_dist_kernel(x_ref, y_ref, rx_ref, ry_ref, o_ref):
    """x: (BB,TM,D), y: (BB,TN,D), rx: (BB,TM,1) f32, ry: (BB,1,TN) f32, o: (BB,TM,TN)."""
    x = x_ref[...]
    # Fold the -2 into the small (BB, TM, D) operand (exact for float dtypes).
    # MXU operands keep the native input dtype; accumulation is f32.  The
    # contraction is over the last dims, so no y^T is ever materialized.
    neg2x = x * jnp.asarray(-2.0, dtype=x.dtype)
    zz = lax.dot_general(
        neg2x, y_ref[...],
        dimension_numbers=(((2,), (2,)), ((0,), (0,))),
        preferred_element_type=jnp.float32)                       # (BB, TM, TN)
    # ||x||^2 / ||y||^2 are precomputed in the wrapper (hoisted out of the grid
    # loop); just broadcast-add them to the cross term.  Note: like the PyTorch
    # reference, cancellation can yield tiny negative values for coincident
    # points; no clamp is applied here to match the reference semantics.
    o_ref[...] = (zz + rx_ref[...] + ry_ref[...]).astype(o_ref.dtype)


def batch_pairwise_dist(x, y, *, tile_m=512, tile_n=2048, out_dtype=jnp.float32):
    """x: (B, Nx, D), y: (B, Ny, D) -> P: (B, Nx, Ny) in out_dtype.

    Pass out_dtype=jnp.bfloat16 to halve output HBM traffic when the caller
    can accept it (f32 accumulation is kept in-kernel either way).
    """
    B, Nx, D = x.shape
    By, Ny, Dy = y.shape
    assert B == By and D == Dy

    out_itemsize = jnp.dtype(out_dtype).itemsize
    in_itemsize = max(x.dtype.itemsize, y.dtype.itemsize)

    # Lane-dense, (8,128)-aligned tiles, clamped to the (padded) problem size.
    TM = _round_up(min(tile_m, _round_up(Nx, 8)), 8)
    TN = _round_up(min(tile_n, _round_up(Ny, 128)), 128)

    # Shrink tiles (only triggers for very large D) until one batch element of
    # a grid step fits the per-step VMEM budget.
    VMEM_BUDGET = 36 << 20      # leaves slack under the 48 MiB scoped limit
    while _per_batch_vmem_bytes(TM, TN, D, in_itemsize, out_itemsize) > VMEM_BUDGET:
        if TN > 128 and TN >= TM:
            TN //= 2
        elif TM > 8:
            TM = max(8, _round_up(TM // 2, 8))
        elif TN > 128:
            TN //= 2
        else:
            break

    # Batch-block small problems so each ~0.35us grid step does enough work.
    # BB is a *divisor* of B -> no phantom padded batches.
    per_batch = _per_batch_vmem_bytes(TM, TN, D, in_itemsize, out_itemsize)
    BB = _largest_divisor_leq(B, max(1, VMEM_BUDGET // per_batch))

    # Guarantee >= 2 grid steps along a parallel axis when possible so v7x's
    # second TensorCore has work (harmless on single-core v5e/v6e).
    def _grid_steps(bb, tm, tn):
        return (B // bb) * (-(-Nx // tm)) * (-(-Ny // tn))

    if _grid_steps(BB, TM, TN) == 1:
        if B >= 2:
            BB = _largest_divisor_leq(B, B // 2)
        elif TM > 8:
            TM = max(8, _round_up(TM // 2, 8))
        elif TN > 128:
            TN //= 2

    Nxp = _round_up(Nx, TM)
    Nyp = _round_up(Ny, TN)

    if Nxp != Nx:
        x = jnp.pad(x, ((0, 0), (0, Nxp - Nx), (0, 0)))
    if Nyp != Ny:
        y = jnp.pad(y, ((0, 0), (0, Nyp - Ny), (0, 0)))

    # Hoist the squared norms out of the grid loop (cheap XLA reductions).
    # Padded rows are zeros -> zero norms -> padded P entries are sliced away.
    xf = x.astype(jnp.float32)
    yf = y.astype(jnp.float32)
    rx = jnp.sum(xf * xf, axis=-1, keepdims=True)          # (B, Nxp, 1)
    ry = jnp.sum(yf * yf, axis=-1)[:, None, :]             # (B, 1, Nyp)

    grid = (B // BB, Nxp // TM, Nyp // TN)
    n_i = Nxp // TM

    cost = pl.CostEstimate(
        flops=2 * B * Nxp * Nyp * (D + 1),
        transcendentals=0,
        bytes_accessed=int(
            B * Nxp * D * x.dtype.itemsize                 # x streamed once
            + n_i * B * Nyp * D * y.dtype.itemsize         # y re-fetched per i-block
            + B * Nxp * 4 + n_i * B * Nyp * 4              # rx once, ry re-fetched
            + B * Nxp * Nyp * out_itemsize),               # output writeback
    )

    out = pl.pallas_call(
        _pairwise_dist_kernel,
        out_shape=jax.ShapeDtypeStruct((B, Nxp, Nyp), out_dtype),
        grid_spec=pltpu.PrefetchScalarGridSpec(
            num_scalar_prefetch=0,
            grid=grid,
            in_specs=[
                pl.BlockSpec((BB, TM, D), lambda b, i, j: (b, i, 0)),
                pl.BlockSpec((BB, TN, D), lambda b, i, j: (b, j, 0)),
                pl.BlockSpec((BB, TM, 1), lambda b, i, j: (b, i, 0)),
                pl.BlockSpec((BB, 1, TN), lambda b, i, j: (b, 0, j)),
            ],
            out_specs=pl.BlockSpec((BB, TM, TN), lambda b, i, j: (b, i, j)),
        ),
        compiler_params=pltpu.CompilerParams(
            dimension_semantics=("parallel", "parallel", "parallel"),
            vmem_limit_bytes=48 * 1024 * 1024,
        ),
        cost_estimate=cost,
    )(x, y, rx, ry)

    if (Nxp, Nyp) != (Nx, Ny):
        out = out[:, :Nx, :Ny]
    return out


def _reference(x, y):
    zz = jnp.einsum("bnd,bmd->bnm", x, y)
    rx = jnp.sum(x * x, axis=-1)[:, :, None]   # (B, Nx, 1)
    ry = jnp.sum(y * y, axis=-1)[:, None, :]   # (B, 1, Ny)
    return rx + ry - 2.0 * zz


# TODO(synk): _Distance.forward(preds, gts) is `pass` in the PyTorch module
# (no computation); only batch_pairwise_dist is implemented here.

if __name__ == "__main__":
    key = jax.random.PRNGKey(0)
    kx, ky = jax.random.split(key)

    # Small point-cloud-like shapes: batch=2, 128 points, 32-D features.
    B, Nx, Ny, D = 2, 128, 128, 32
    x = jax.random.normal(kx, (B, Nx, D), dtype=jnp.float32)
    y = jax.random.normal(ky, (B, Ny, D), dtype=jnp.float32)

    P = jax.block_until_ready(batch_pairwise_dist(x, y))
    P_ref = _reference(x, y)
    assert P.shape == (B, Nx, Ny)
    assert jnp.allclose(P, P_ref, atol=1e-3, rtol=1e-4), "mismatch vs reference"

    # Padded / non-tile-aligned path: odd batch, 3-D point clouds.
    kx2, ky2 = jax.random.split(ky)
    x2 = jax.random.normal(kx2, (3, 100, 3), dtype=jnp.float32)
    y2 = jax.random.normal(ky2, (3, 70, 3), dtype=jnp.float32)
    P2 = jax.block_until_ready(batch_pairwise_dist(x2, y2))
    P2_ref = _reference(x2, y2)
    assert P2.shape == (3, 100, 70)
    assert jnp.allclose(P2, P2_ref, atol=1e-3, rtol=1e-4), "mismatch vs reference (padded)"

    print("KERNEL_OK")
</pallas_src>

<mosaic_0001>
module attributes {stable_mosaic.version = 11 : i64} {
  func.func @_pairwise_dist_kernel(%arg0: i32, %arg1: i32, %arg2: i32, %arg3: memref<1x128x32xf32, #tpu.memory_space<vmem>>, %arg4: memref<1x128x32xf32, #tpu.memory_space<vmem>>, %arg5: memref<1x128x1xf32, #tpu.memory_space<vmem>>, %arg6: memref<1x1x128xf32, #tpu.memory_space<vmem>>, %arg7: memref<1x128x128xf32, #tpu.memory_space<vmem>>) attributes {dimension_semantics = [#tpu.dimension_semantics<parallel>, #tpu.dimension_semantics<parallel>, #tpu.dimension_semantics<parallel>], iteration_bounds = array<i64: 2, 1, 1>, scalar_prefetch = 0 : i64, scratch_operands = 0 : i64, tpu.core_type = #tpu.core_type<tc>, window_params = [{transform_indices = @transform_0, window_bounds = array<i64: 1, 128, 32>}, {transform_indices = @transform_1, window_bounds = array<i64: 1, 128, 32>}, {transform_indices = @transform_2, window_bounds = array<i64: 1, 128, 1>}, {transform_indices = @transform_3, window_bounds = array<i64: 1, 1, 128>}, {transform_indices = @transform_4, window_bounds = array<i64: 1, 128, 128>}]} {
    %c0 = arith.constant 0 : index
    %c0_0 = arith.constant 0 : index
    %c0_1 = arith.constant 0 : index
    %0 = vector.load %arg3[%c0, %c0_0, %c0_1] : memref<1x128x32xf32, #tpu.memory_space<vmem>>, vector<1x128x32xf32>
    %cst = arith.constant -2.000000e+00 : f32
    %1 = vector.broadcast %cst : f32 to vector<1x128x32xf32>
    %2 = arith.mulf %0, %1 : vector<1x128x32xf32>
    %c0_2 = arith.constant 0 : index
    %c0_3 = arith.constant 0 : index
    %c0_4 = arith.constant 0 : index
    %3 = vector.load %arg4[%c0_2, %c0_3, %c0_4] : memref<1x128x32xf32, #tpu.memory_space<vmem>>, vector<1x128x32xf32>
    %cst_5 = arith.constant dense<0.000000e+00> : vector<1x128x128xf32>
    %4 = tpu.matmul %2, %3, %cst_5 {dimension_numbers = #tpu.dot_dimension_numbers<[2], [2], [1], [1], [0, 0, 0, 1, 1, 1], [0], [0]>} : vector<1x128x32xf32>, vector<1x128x32xf32>, vector<1x128x128xf32> -> vector<1x128x128xf32>
    %c0_6 = arith.constant 0 : index
    %c0_7 = arith.constant 0 : index
    %c0_8 = arith.constant 0 : index
    %5 = vector.load %arg5[%c0_6, %c0_7, %c0_8] : memref<1x128x1xf32, #tpu.memory_space<vmem>>, vector<1x128x1xf32>
    %6 = vector.broadcast %5 : vector<1x128x1xf32> to vector<1x128x128xf32>
    %7 = arith.addf %4, %6 : vector<1x128x128xf32>
    %c0_9 = arith.constant 0 : index
    %c0_10 = arith.constant 0 : index
    %c0_11 = arith.constant 0 : index
    %8 = vector.load %arg6[%c0_9, %c0_10, %c0_11] : memref<1x1x128xf32, #tpu.memory_space<vmem>>, vector<1x1x128xf32>
    %9 = vector.broadcast %8 : vector<1x1x128xf32> to vector<1x128x128xf32>
    %10 = arith.addf %7, %9 : vector<1x128x128xf32>
    %c0_12 = arith.constant 0 : index
    %c0_13 = arith.constant 0 : index
    %c0_14 = arith.constant 0 : index
    %11 = vector.load %arg7[%c0_12, %c0_13, %c0_14] : memref<1x128x128xf32, #tpu.memory_space<vmem>>, vector<1x128x128xf32>
    tpu.vector_store %arg7[%c0_12, %c0_13, %c0_14], %10 {strides = array<i32>} : memref<1x128x128xf32, #tpu.memory_space<vmem>>, vector<1x128x128xf32>,
    return
  }
  func.func @transform_0(%arg0: i32, %arg1: i32, %arg2: i32) -> (i32, i32, i32) {
    %c0_i32 = arith.constant 0 : i32
    %c0_i32_0 = arith.constant 0 : i32
    return %arg0, %arg1, %c0_i32 : i32, i32, i32
  }
  func.func @transform_1(%arg0: i32, %arg1: i32, %arg2: i32) -> (i32, i32, i32) {
    %c0_i32 = arith.constant 0 : i32
    %c0_i32_0 = arith.constant 0 : i32
    return %arg0, %arg2, %c0_i32 : i32, i32, i32
  }
  func.func @transform_2(%arg0: i32, %arg1: i32, %arg2: i32) -> (i32, i32, i32) {
    %c0_i32 = arith.constant 0 : i32
    %c0_i32_0 = arith.constant 0 : i32
    return %arg0, %arg1, %c0_i32 : i32, i32, i32
  }
  func.func @transform_3(%arg0: i32, %arg1: i32, %arg2: i32) -> (i32, i32, i32) {
    %c0_i32 = arith.constant 0 : i32
    %c0_i32_0 = arith.constant 0 : i32
    return %arg0, %c0_i32, %arg2 : i32, i32, i32
  }
  func.func @transform_4(%arg0: i32, %arg1: i32, %arg2: i32) -> (i32, i32, i32) {
    %c0_i32 = arith.constant 0 : i32
    return %arg0, %arg1, %arg2 : i32, i32, i32
  }
}

</mosaic_0001>

<llo_original>
// kernel: tpu_custom_call.1
$region0: #{tpu_custom_call.1}
  #allocation0 [shape = 'u32[]', space=smem, size = 0x4, offset = 0x4, fixed_abs, tag = 'smem constant byte address 0x4 - core index']
  #allocation1 [shape = 'u32[144,128]{1,0:T(1,128)}', space=vmem, size = 0x12000, scoped, tag = 'internal scratch']
  %s0 = inlined_call_operand.vmem [shape: f32[2,128,32], index: 0, kind: input, shape index: {}]
  %s1 = inlined_call_operand.vmem [shape: f32[2,128,32], index: 1, kind: input, shape index: {}]
  %s2 = inlined_call_operand.vmem [shape: f32[2,128,1], index: 2, kind: input, shape index: {}]
  %s3 = inlined_call_operand.vmem [shape: f32[2,1,128], index: 3, kind: input, shape index: {}]
  %s4 = inlined_call_operand.hbm [shape: f32[2,128,128], index: 4, kind: output, shape index: {}]
  %s5 = sld [smem:[#allocation0]]
  $region49: #{tpu_custom_call.1} parent=0
    _
  %s7 = ssub.s32 1, %s5
  %s8 = scalar_select 0, %s7, %s5
  $region1: #{tpu_custom_call.1} parent=0
    #allocation2 [shape = 'u8[131072]{0}', space=vmem, size = 0x20000, scoped, tag = 'output window, operand 0']
    #allocation3 [shape = 's32[2]{0}', space=sflag, size = 0x8, scoped, tag = 'scoped memory for tpu_custom_call.1']
    %9 = vsyncpa [#allocation3], 0
    %s10 = scalar_lea.sflag [#allocation3], 1
    %11 = vsyncpa %s10, 0
    loop: start=0, step=1, limit=4
    $region2: #{tpu_custom_call.1} parent=1 // loop_pre_header
      _
    $region3: #{tpu_custom_call.1} parent=1 // loop_header
      %s13 = sphi 0, %s17
      %p14 = scmp.ge.s32.totalorder %s13, 4
      %s20 = sphi 0, %s39
      %s21 = sphi 0, %s35
      %s22 = sphi 0, %s31
      %s23 = sphi 0, %s20
      %s24 = sphi 0, %s21
      %s25 = sphi 0, %s22
      %s26 = sphi 0, %s23
      %s27 = sphi 0, %s24
      %s28 = sphi 0, %s25
      %s44 = sphi 0, %s46
      %s47 = sphi 0, %s44
      %s48 = sphi 0, %s47
      %s64 = sphi 0, %s48
      %s72 = sphi 0, %s74
      %s75 = sphi 0, %s72
      %s76 = sphi 0, %s75
      %s92 = sphi 0, %s76
      %s100 = sphi 0, %s102
      %s103 = sphi 0, %s100
      %s104 = sphi 0, %s103
      %s120 = sphi 0, %s104
      %s128 = sphi 0, %s130
      %s131 = sphi 0, %s128
      %s132 = sphi 0, %s131
      %s148 = sphi 0, %s132
      %s158 = sphi 0, %s160
      %s161 = sphi 0, %s158
      %s162 = sphi 0, %s161
      %s178 = sphi 0, %s162
    $region4: #{tpu_custom_call.1} parent=1 // loop_header_branch
      %16 = sbr.rel (%p14) target = $region8
    $region5: #{tpu_custom_call.1} parent=1 // loop_body
      %s18 = ssub.s32 %s13, 1
      %s19 = ssub.s32 %s13, 2
      %s29 = sadd.s32 1, %s22
      %p30 = scmp.ge.s32.totalorder %s29, 1
      %s31 = scalar_select %p30, 0, %s29
      %s32 = sadd.s32 1, %s21
      %s33 = scalar_select %p30, %s32, %s21
      %p34 = scmp.ge.s32.totalorder %s33, 1
      %s35 = scalar_select %p34, 0, %s33
      %s36 = sadd.s32 1, %s20
      %s37 = scalar_select %p34, %s36, %s20
      %p38 = scmp.ge.s32.totalorder %s37, 2
      %s39 = scalar_select %p38, 0, %s37
      %s40 = ssub.s32 %s20, %s39
      %s41 = ssub.s32 %s21, %s35
      %s42 = sor.u32 %s40, %s41
      %p43 = scmp.eq.s32.totalorder %s42, 0
      %s45 = sadd.s32 %s44, 1
      %s46 = scalar_select %p43, %s44, %s45
      %p49 = pneg %p43
      %p50 = scmp.eq.s32.totalorder %s13, 1
      %p51 = por %p49, %p50
      %p52 = scmp.ne.s32.totalorder %s44, %s47
      %p53 = scmp.eq.s32.totalorder %s13, 0
      %p54 = por %p52, %p53
      %p55 = scmp.ne.s32.totalorder %s44, %s47
      %p56 = scmp.eq.s32.totalorder %s18, 1
      %p57 = por %p55, %p56
      %p58 = scmp.ne.s32.totalorder %s47, %s48
      %p59 = scmp.eq.s32.totalorder %s18, 0
      %p60 = por %p58, %p59
      %p61 = scmp.ne.s32.totalorder %s47, %s48
      %p62 = scmp.eq.s32.totalorder %s19, 1
      %p63 = por %p61, %p62
      %p65 = scmp.ne.s32.totalorder %s48, %s64
      %p66 = scmp.eq.s32.totalorder %s19, 0
      %p67 = por %p65, %p66
      %s68 = ssub.s32 %s20, %s39
      %s69 = ssub.s32 %s22, %s31
      %s70 = sor.u32 %s68, %s69
      %p71 = scmp.eq.s32.totalorder %s70, 0
      %s73 = sadd.s32 %s72, 1
      %s74 = scalar_select %p71, %s72, %s73
      %p77 = pneg %p71
      %p78 = scmp.eq.s32.totalorder %s13, 1
      %p79 = por %p77, %p78
      %p80 = scmp.ne.s32.totalorder %s72, %s75
      %p81 = scmp.eq.s32.totalorder %s13, 0
      %p82 = por %p80, %p81
      %p83 = scmp.ne.s32.totalorder %s72, %s75
      %p84 = scmp.eq.s32.totalorder %s18, 1
      %p85 = por %p83, %p84
      %p86 = scmp.ne.s32.totalorder %s75, %s76
      %p87 = scmp.eq.s32.totalorder %s18, 0
      %p88 = por %p86, %p87
      %p89 = scmp.ne.s32.totalorder %s75, %s76
      %p90 = scmp.eq.s32.totalorder %s19, 1
      %p91 = por %p89, %p90
      %p93 = scmp.ne.s32.totalorder %s76, %s92
      %p94 = scmp.eq.s32.totalorder %s19, 0
      %p95 = por %p93, %p94
      %s96 = ssub.s32 %s20, %s39
      %s97 = ssub.s32 %s21, %s35
      %s98 = sor.u32 %s96, %s97
      %p99 = scmp.eq.s32.totalorder %s98, 0
      %s101 = sadd.s32 %s100, 1
      %s102 = scalar_select %p99, %s100, %s101
      %p105 = pneg %p99
      %p106 = scmp.eq.s32.totalorder %s13, 1
      %p107 = por %p105, %p106
      %p108 = scmp.ne.s32.totalorder %s100, %s103
      %p109 = scmp.eq.s32.totalorder %s13, 0
      %p110 = por %p108, %p109
      %p111 = scmp.ne.s32.totalorder %s100, %s103
      %p112 = scmp.eq.s32.totalorder %s18, 1
      %p113 = por %p111, %p112
      %p114 = scmp.ne.s32.totalorder %s103, %s104
      %p115 = scmp.eq.s32.totalorder %s18, 0
      %p116 = por %p114, %p115
      %p117 = scmp.ne.s32.totalorder %s103, %s104
      %p118 = scmp.eq.s32.totalorder %s19, 1
      %p119 = por %p117, %p118
      %p121 = scmp.ne.s32.totalorder %s104, %s120
      %p122 = scmp.eq.s32.totalorder %s19, 0
      %p123 = por %p121, %p122
      %s124 = ssub.s32 %s20, %s39
      %s125 = ssub.s32 %s22, %s31
      %s126 = sor.u32 %s124, %s125
      %p127 = scmp.eq.s32.totalorder %s126, 0
      %s129 = sadd.s32 %s128, 1
      %s130 = scalar_select %p127, %s128, %s129
      %p133 = pneg %p127
      %p134 = scmp.eq.s32.totalorder %s13, 1
      %p135 = por %p133, %p134
      %p136 = scmp.ne.s32.totalorder %s128, %s131
      %p137 = scmp.eq.s32.totalorder %s13, 0
      %p138 = por %p136, %p137
      %p139 = scmp.ne.s32.totalorder %s128, %s131
      %p140 = scmp.eq.s32.totalorder %s18, 1
      %p141 = por %p139, %p140
      %p142 = scmp.ne.s32.totalorder %s131, %s132
      %p143 = scmp.eq.s32.totalorder %s18, 0
      %p144 = por %p142, %p143
      %p145 = scmp.ne.s32.totalorder %s131, %s132
      %p146 = scmp.eq.s32.totalorder %s19, 1
      %p147 = por %p145, %p146
      %p149 = scmp.ne.s32.totalorder %s132, %s148
      %p150 = scmp.eq.s32.totalorder %s19, 0
      %p151 = por %p149, %p150
      %s152 = ssub.s32 %s20, %s39
      %s153 = ssub.s32 %s21, %s35
      %s154 = sor.u32 %s152, %s153
      %s155 = ssub.s32 %s22, %s31
      %s156 = sor.u32 %s154, %s155
      %p157 = scmp.eq.s32.totalorder %s156, 0
      %s159 = sadd.s32 %s158, 1
      %s160 = scalar_select %p157, %s158, %s159
      %p163 = pneg %p157
      %p164 = scmp.eq.s32.totalorder %s13, 1
      %p165 = por %p163, %p164
      %p166 = scmp.ne.s32.totalorder %s158, %s161
      %p167 = scmp.eq.s32.totalorder %s13, 0
      %p168 = por %p166, %p167
      %p169 = scmp.ne.s32.totalorder %s158, %s161
      %p170 = scmp.eq.s32.totalorder %s18, 1
      %p171 = por %p169, %p170
      %p172 = scmp.ne.s32.totalorder %s161, %s162
      %p173 = scmp.eq.s32.totalorder %s18, 0
      %p174 = por %p172, %p173
      %p175 = scmp.ne.s32.totalorder %s161, %s162
      %p176 = scmp.eq.s32.totalorder %s19, 1
      %p177 = por %p175, %p176
      %p179 = scmp.ne.s32.totalorder %s162, %s178
      %p180 = scmp.eq.s32.totalorder %s19, 0
      %p181 = por %p179, %p180
      %p182 = scmp.le.s32.totalorder 1, %s13
      %p183 = scmp.lt.s32.totalorder %s13, 3
      %p184 = pnand %p182, %p183
      %p185 = pneg %p184
      // Predicated region
      $region9: #{tpu_custom_call.1} parent=5 // pred_check
        _
      $region10: #{tpu_custom_call.1} parent=5 // pred_check_branch
        %187 = sbr.rel (%p184) target = $region12
      $region11: #{tpu_custom_call.1} parent=5 // pred_region
        %s188 = ssub.s32 %s13, 1
      $region12: #{tpu_custom_call.1} parent=5 // pred_fallthru
        _
      %p189 = scmp.lt.s32.totalorder %s13, 2
      // Predicated region
      $region13: #{tpu_custom_call.1} parent=5 // pred_check
        %p190 = pneg %p189
      $region14: #{tpu_custom_call.1} parent=5 // pred_check_branch
        %192 = sbr.rel (%p190) target = $region16
      $region15: #{tpu_custom_call.1} parent=5 // pred_region
        // Predicated region
        $region17: #{tpu_custom_call.1} parent=15 // pred_check
          %p193 = pneg %p54
        $region18: #{tpu_custom_call.1} parent=15 // pred_check_branch
          %195 = sbr.rel (%p193) target = $region20
        $region19: #{tpu_custom_call.1} parent=15 // pred_region
          %s196 = smul.u32 16, %s21
          %p197 = scmp.lt.s32.totalorder %s20, 1
          %s198 = scalar_select %p197, %s20, 1
          %p199 = scmp.lt.s32.totalorder %s196, 15
          %s200 = scalar_select %p199, %s196, 15
          %s201 = smul.addr %s198, 16
          %s202 = sadd.s32 %s200, %s201
          %s203 = smul.addr %s202, 8
          %s204 = scalar_lea.vmem %s0, %s203
          %s205 = smul.u32 16, %s21
        $region20: #{tpu_custom_call.1} parent=15 // pred_fallthru
          _
        // Predicated region
        $region21: #{tpu_custom_call.1} parent=15 // pred_check
          %p206 = pneg %p82
        $region22: #{tpu_custom_call.1} parent=15 // pred_check_branch
          %208 = sbr.rel (%p206) target = $region24
        $region23: #{tpu_custom_call.1} parent=15 // pred_region
          %s209 = smul.u32 16, %s22
          %p210 = scmp.lt.s32.totalorder %s20, 1
          %s211 = scalar_select %p210, %s20, 1
          %p212 = scmp.lt.s32.totalorder %s209, 15
          %s213 = scalar_select %p212, %s209, 15
          %s214 = smul.addr %s211, 16
          %s215 = sadd.s32 %s213, %s214
          %s216 = smul.addr %s215, 8
          %s217 = scalar_lea.vmem %s1, %s216
          %s218 = smul.u32 16, %s22
        $region24: #{tpu_custom_call.1} parent=15 // pred_fallthru
          _
        // Predicated region
        $region25: #{tpu_custom_call.1} parent=15 // pred_check
          %p219 = pneg %p110
        $region26: #{tpu_custom_call.1} parent=15 // pred_check_branch
          %221 = sbr.rel (%p219) target = $region28
        $region27: #{tpu_custom_call.1} parent=15 // pred_region
          %s222 = smul.u32 16, %s21
          %p223 = scmp.lt.s32.totalorder %s20, 1
          %s224 = scalar_select %p223, %s20, 1
          %p225 = scmp.lt.s32.totalorder %s222, 15
          %s226 = scalar_select %p225, %s222, 15
          %s227 = smul.addr %s224, 16
          %s228 = sadd.s32 %s226, %s227
          %s229 = smul.addr %s228, 8
          %s230 = scalar_lea.vmem %s2, %s229
          %s231 = smul.u32 16, %s21
        $region28: #{tpu_custom_call.1} parent=15 // pred_fallthru
          _
        // Predicated region
        $region29: #{tpu_custom_call.1} parent=15 // pred_check
          %p232 = pneg %p138
        $region30: #{tpu_custom_call.1} parent=15 // pred_check_branch
          %234 = sbr.rel (%p232) target = $region32
        $region31: #{tpu_custom_call.1} parent=15 // pred_region
          %p235 = scmp.lt.s32.totalorder %s20, 1
          %s236 = scalar_select %p235, %s20, 1
          %p237 = scmp.lt.s32.totalorder %s22, 0
          %s238 = scalar_select %p237, %s22, 0
          %s239 = sadd.s32 %s238, %s236
          %s240 = scalar_lea.vmem %s3, %s239
        $region32: #{tpu_custom_call.1} parent=15 // pred_fallthru
          _
      $region16: #{tpu_custom_call.1} parent=5 // pred_fallthru
        _
      %p241 = scmp.le.s32.totalorder 1, %s13
      %p242 = scmp.lt.s32.totalorder %s13, 3
      %p243 = pnand %p241, %p242
      %p244 = pneg %p243
      // Predicated region
      $region33: #{tpu_custom_call.1} parent=5 // pred_check
        _
      $region34: #{tpu_custom_call.1} parent=5 // pred_check_branch
        %246 = sbr.rel (%p243) target = $region36
      $region35: #{tpu_custom_call.1} parent=5 // pred_region
        %s247 = ssub.s32 %s13, 1
        %s248 = smul.u32 16, %s24
        %p249 = scmp.lt.s32.totalorder %s23, 1
        %s250 = scalar_select %p249, %s23, 1
        %p251 = scmp.lt.s32.totalorder %s248, 15
        %s252 = scalar_select %p251, %s248, 15
        %s253 = smul.addr %s250, 16
        %s254 = sadd.s32 %s252, %s253
        %s255 = smul.addr %s254, 8
        %s256 = scalar_lea.vmem %s0, %s255
        %p257 = pneg %p60
        %p258 = pneg %p57
        %s259 = smul.u32 16, %s25
        %p260 = scmp.lt.s32.totalorder %s23, 1
        %s261 = scalar_select %p260, %s23, 1
        %p262 = scmp.lt.s32.totalorder %s259, 15
        %s263 = scalar_select %p262, %s259, 15
        %s264 = smul.addr %s261, 16
        %s265 = sadd.s32 %s263, %s264
        %s266 = smul.addr %s265, 8
        %s267 = scalar_lea.vmem %s1, %s266
        %p268 = pneg %p88
        %p269 = pneg %p85
        %s270 = smul.u32 16, %s24
        %p271 = scmp.lt.s32.totalorder %s23, 1
        %s272 = scalar_select %p271, %s23, 1
        %p273 = scmp.lt.s32.totalorder %s270, 15
        %s274 = scalar_select %p273, %s270, 15
        %s275 = smul.addr %s272, 16
        %s276 = sadd.s32 %s274, %s275
        %s277 = smul.addr %s276, 8
        %s278 = scalar_lea.vmem %s2, %s277
        %p279 = pneg %p116
        %p280 = pneg %p113
        %p281 = scmp.lt.s32.totalorder %s23, 1
        %s282 = scalar_select %p281, %s23, 1
        %p283 = scmp.lt.s32.totalorder %s25, 0
        %s284 = scalar_select %p283, %s25, 0
        %s285 = sadd.s32 %s284, %s282
        %s286 = scalar_lea.vmem %s3, %s285
        %p287 = pneg %p144
        %p288 = pneg %p141
        %p289 = pneg %p174
        %p290 = pneg %p171
        %s291 = sand.u32 %s161, 1
        %s292 = scalar_lea.sflag [#allocation3], %s291
        %s293 = sand.u32 %s161, 1
        %s294 = smul.addr %s293, 128
        %s295 = scalar_lea.vmem [#allocation2], %s294
        %s296 = smul.u32 16, %s24
        %p297 = scmp.lt.s32.totalorder %s23, 1
        %s298 = scalar_select %p297, %s23, 1
        %p299 = scmp.lt.s32.totalorder %s296, 15
        %s300 = scalar_select %p299, %s296, 15
        %s301 = smul.addr %s298, 16
        %s302 = sadd.s32 %s300, %s301
        %s303 = smul.addr %s302, 8
        %s304 = scalar_lea.vmem %s0, %s303
        %s305 = smul.u32 16, %s24
        %s306 = smul.u32 16, %s25
        %p307 = scmp.lt.s32.totalorder %s23, 1
        %s308 = scalar_select %p307, %s23, 1
        %p309 = scmp.lt.s32.totalorder %s306, 15
        %s310 = scalar_select %p309, %s306, 15
        %s311 = smul.addr %s308, 16
        %s312 = sadd.s32 %s310, %s311
        %s313 = smul.addr %s312, 8
        %s314 = scalar_lea.vmem %s1, %s313
        %s315 = smul.u32 16, %s25
        %s316 = smul.u32 16, %s24
        %p317 = scmp.lt.s32.totalorder %s23, 1
        %s318 = scalar_select %p317, %s23, 1
        %p319 = scmp.lt.s32.totalorder %s316, 15
        %s320 = scalar_select %p319, %s316, 15
        %s321 = smul.addr %s318, 16
        %s322 = sadd.s32 %s320, %s321
        %s323 = smul.addr %s322, 8
        %s324 = scalar_lea.vmem %s2, %s323
        %s325 = smul.u32 16, %s24
        %p326 = scmp.lt.s32.totalorder %s23, 1
        %s327 = scalar_select %p326, %s23, 1
        %p328 = scmp.lt.s32.totalorder %s25, 0
        %s329 = scalar_select %p328, %s25, 0
        %s330 = sadd.s32 %s329, %s327
        %s331 = scalar_lea.vmem %s3, %s330
        %s332 = smul.u32 16, %s24
        %v333 = vld [vmem:[%s304] sm:$0xff]
        %v334 = vld [vmem:[%s304 + $0x8] sm:$0xff]
        %v335 = vld [vmem:[%s304 + $0x10] sm:$0xff]
        %v336 = vld [vmem:[%s304 + $0x18] sm:$0xff]
        %v337 = vld [vmem:[%s304 + $0x20] sm:$0xff]
        %v338 = vld [vmem:[%s304 + $0x28] sm:$0xff]
        %v339 = vld [vmem:[%s304 + $0x30] sm:$0xff]
        %v340 = vld [vmem:[%s304 + $0x38] sm:$0xff]
        %v341 = vld [vmem:[%s304 + $0x40] sm:$0xff]
        %v342 = vld [vmem:[%s304 + $0x48] sm:$0xff]
        %v343 = vld [vmem:[%s304 + $0x50] sm:$0xff]
        %v344 = vld [vmem:[%s304 + $0x58] sm:$0xff]
        %v345 = vld [vmem:[%s304 + $0x60] sm:$0xff]
        %v346 = vld [vmem:[%s304 + $0x68] sm:$0xff]
        %v347 = vld [vmem:[%s304 + $0x70] sm:$0xff]
        %v348 = vld [vmem:[%s304 + $0x78] sm:$0xff]
        %v349 = vmul.f32 %v333, -2.0
        %v350 = vmul.f32 %v334, -2.0
        %v351 = vmul.f32 %v335, -2.0
        %v352 = vmul.f32 %v336, -2.0
        %v353 = vmul.f32 %v337, -2.0
        %v354 = vmul.f32 %v338, -2.0
        %v355 = vmul.f32 %v339, -2.0
        %v356 = vmul.f32 %v340, -2.0
        %v357 = vmul.f32 %v341, -2.0
        %v358 = vmul.f32 %v342, -2.0
        %v359 = vmul.f32 %v343, -2.0
        %v360 = vmul.f32 %v344, -2.0
        %v361 = vmul.f32 %v345, -2.0
        %v362 = vmul.f32 %v346, -2.0
        %v363 = vmul.f32 %v347, -2.0
        %v364 = vmul.f32 %v348, -2.0
        %v365 = vld [vmem:[%s314] sm:$0xff]
        %v366 = vld [vmem:[%s314 + $0x8] sm:$0xff]
        %v367 = vld [vmem:[%s314 + $0x10] sm:$0xff]
        %v368 = vld [vmem:[%s314 + $0x18] sm:$0xff]
        %v369 = vld [vmem:[%s314 + $0x20] sm:$0xff]
        %v370 = vld [vmem:[%s314 + $0x28] sm:$0xff]
        %v371 = vld [vmem:[%s314 + $0x30] sm:$0xff]
        %v372 = vld [vmem:[%s314 + $0x38] sm:$0xff]
        %v373 = vld [vmem:[%s314 + $0x40] sm:$0xff]
        %v374 = vld [vmem:[%s314 + $0x48] sm:$0xff]
        %v375 = vld [vmem:[%s314 + $0x50] sm:$0xff]
        %v376 = vld [vmem:[%s314 + $0x58] sm:$0xff]
        %v377 = vld [vmem:[%s314 + $0x60] sm:$0xff]
        %v378 = vld [vmem:[%s314 + $0x68] sm:$0xff]
        %v379 = vld [vmem:[%s314 + $0x70] sm:$0xff]
        %v380 = vld [vmem:[%s314 + $0x78] sm:$0xff]
        %v381 = vld [vmem:[%s324] sm:$0xff]
        %v382 = vld [vmem:[%s324 + $0x8] sm:$0xff]
        %v383 = vld [vmem:[%s324 + $0x10] sm:$0xff]
        %v384 = vld [vmem:[%s324 + $0x18] sm:$0xff]
        %v385 = vld [vmem:[%s324 + $0x20] sm:$0xff]
        %v386 = vld [vmem:[%s324 + $0x28] sm:$0xff]
        %v387 = vld [vmem:[%s324 + $0x30] sm:$0xff]
        %v388 = vld [vmem:[%s324 + $0x38] sm:$0xff]
        %v389 = vld [vmem:[%s324 + $0x40] sm:$0xff]
        %v390 = vld [vmem:[%s324 + $0x48] sm:$0xff]
        %v391 = vld [vmem:[%s324 + $0x50] sm:$0xff]
        %v392 = vld [vmem:[%s324 + $0x58] sm:$0xff]
        %v393 = vld [vmem:[%s324 + $0x60] sm:$0xff]
        %v394 = vld [vmem:[%s324 + $0x68] sm:$0xff]
        %v395 = vld [vmem:[%s324 + $0x70] sm:$0xff]
        %v396 = vld [vmem:[%s324 + $0x78] sm:$0xff]
        %398 = vset.pattern.permute.xlu0 0
        %399 = vperm.xlu0 %398, %v381
        %v400 = vpop.permute.xlu0 %399
        %403 = vset.pattern.permute.xlu0 0
        %404 = vperm.xlu0 %403, %v382
        %v405 = vpop.permute.xlu0 %404
        %408 = vset.pattern.permute.xlu0 0
        %409 = vperm.xlu0 %408, %v383
        %v410 = vpop.permute.xlu0 %409
        %413 = vset.pattern.permute.xlu0 0
        %414 = vperm.xlu0 %413, %v384
        %v415 = vpop.permute.xlu0 %414
        %418 = vset.pattern.permute.xlu0 0
        %419 = vperm.xlu0 %418, %v385
        %v420 = vpop.permute.xlu0 %419
        %423 = vset.pattern.permute.xlu0 0
        %424 = vperm.xlu0 %423, %v386
        %v425 = vpop.permute.xlu0 %424
        %428 = vset.pattern.permute.xlu0 0
        %429 = vperm.xlu0 %428, %v387
        %v430 = vpop.permute.xlu0 %429
        %433 = vset.pattern.permute.xlu0 0
        %434 = vperm.xlu0 %433, %v388
        %v435 = vpop.permute.xlu0 %434
        %438 = vset.pattern.permute.xlu0 0
        %439 = vperm.xlu0 %438, %v389
        %v440 = vpop.permute.xlu0 %439
        %443 = vset.pattern.permute.xlu0 0
        %444 = vperm.xlu0 %443, %v390
        %v445 = vpop.permute.xlu0 %444
        %448 = vset.pattern.permute.xlu0 0
        %449 = vperm.xlu0 %448, %v391
        %v450 = vpop.permute.xlu0 %449
        %453 = vset.pattern.permute.xlu0 0
        %454 = vperm.xlu0 %453, %v392
        %v455 = vpop.permute.xlu0 %454
        %458 = vset.pattern.permute.xlu0 0
        %459 = vperm.xlu0 %458, %v393
        %v460 = vpop.permute.xlu0 %459
        %463 = vset.pattern.permute.xlu0 0
        %464 = vperm.xlu0 %463, %v394
        %v465 = vpop.permute.xlu0 %464
        %468 = vset.pattern.permute.xlu0 0
        %469 = vperm.xlu0 %468, %v395
        %v470 = vpop.permute.xlu0 %469
        %473 = vset.pattern.permute.xlu0 0
        %474 = vperm.xlu0 %473, %v396
        %v475 = vpop.permute.xlu0 %474
        %vm477 = vcmask 261120
        %v479 = vsel %vm477, %v349, 0
        %v482 = vsel %vm477, %v350, 0
        %v485 = vsel %vm477, %v351, 0
        %v488 = vsel %vm477, %v352, 0
        %v491 = vsel %vm477, %v353, 0
        %v494 = vsel %vm477, %v354, 0
        %v497 = vsel %vm477, %v355, 0
        %v500 = vsel %vm477, %v356, 0
        %v503 = vsel %vm477, %v357, 0
        %v506 = vsel %vm477, %v358, 0
        %v509 = vsel %vm477, %v359, 0
        %v512 = vsel %vm477, %v360, 0
        %v515 = vsel %vm477, %v361, 0
        %v518 = vsel %vm477, %v362, 0
        %v521 = vsel %vm477, %v363, 0
        %v524 = vsel %vm477, %v364, 0
        %v527 = vsel %vm477, %v365, 0
        %v530 = vsel %vm477, %v366, 0
        %v533 = vsel %vm477, %v367, 0
        %v536 = vsel %vm477, %v368, 0
        %v539 = vsel %vm477, %v369, 0
        %v542 = vsel %vm477, %v370, 0
        %v545 = vsel %vm477, %v371, 0
        %v548 = vsel %vm477, %v372, 0
        %v551 = vsel %vm477, %v373, 0
        %v554 = vsel %vm477, %v374, 0
        %v557 = vsel %vm477, %v375, 0
        %v560 = vsel %vm477, %v376, 0
        %v563 = vsel %vm477, %v377, 0
        %v566 = vsel %vm477, %v378, 0
        %v569 = vsel %vm477, %v379, 0
        %v572 = vsel %vm477, %v380, 0
        %574 = vmatprep.subr.mxu0 0.0
        %575 = vmatpush1.xpose.msra.mxu0 %v527
        %576 = vmatprep.subr.mxu0 0.0
        %577 = vmatpush1.xpose.msra.mxu0 %v530
        %578 = vmatprep.subr.mxu0 0.0
        %579 = vmatpush1.xpose.msra.mxu0 %v533
        %580 = vmatprep.subr.mxu0 0.0
        %581 = vmatpush1.xpose.msra.mxu0 %v536
        %582 = vmatprep.subr.mxu0 0.0
        %583 = vmatpush1.xpose.msra.mxu0 %v539
        %584 = vmatprep.subr.mxu0 0.0
        %585 = vmatpush1.xpose.msra.mxu0 %v542
        %586 = vmatprep.subr.mxu0 0.0
        %587 = vmatpush1.xpose.msra.mxu0 %v545
        %588 = vmatprep.subr.mxu0 0.0
        %589 = vmatpush1.xpose.msra.mxu0 %v548
        %590 = vmatprep.subr.mxu0 0.0
        %591 = vmatpush1.xpose.msra.mxu0 %v551
        %592 = vmatprep.subr.mxu0 0.0
        %593 = vmatpush1.xpose.msra.mxu0 %v554
        %594 = vmatprep.subr.mxu0 0.0
        %595 = vmatpush1.xpose.msra.mxu0 %v557
        %596 = vmatprep.subr.mxu0 0.0
        %597 = vmatpush1.xpose.msra.mxu0 %v560
        %598 = vmatprep.subr.mxu0 0.0
        %599 = vmatpush1.xpose.msra.mxu0 %v563
        %600 = vmatprep.subr.mxu0 0.0
        %601 = vmatpush1.xpose.msra.mxu0 %v566
        %602 = vmatprep.subr.mxu0 0.0
        %603 = vmatpush1.xpose.msra.mxu0 %v569
        %604 = vmatprep.subr.mxu0 0.0
        %605 = vmatpush1.xpose.msra.mxu0 %v572
        %606 = vmatprep.subr.mxu0 0.0
        %607 = vmatpush1.xpose.msra.mxu0 0.0
        %608 = vmatprep.subr.mxu0 0.0
        %609 = vmatpush1.xpose.msra.mxu0 0.0
        %610 = vmatprep.subr.mxu0 0.0
        %611 = vmatpush1.xpose.msra.mxu0 0.0
        %612 = vmatprep.subr.mxu0 0.0
        %613 = vmatpush1.xpose.msra.mxu0 0.0
        %614 = vmatprep.subr.mxu0 0.0
        %615 = vmatpush1.xpose.msra.mxu0 0.0
        %616 = vmatprep.subr.mxu0 0.0
        %617 = vmatpush1.xpose.msra.mxu0 0.0
        %618 = vmatprep.subr.mxu0 0.0
        %619 = vmatpush1.xpose.msra.mxu0 0.0
        %620 = vmatprep.subr.mxu0 0.0
        %621 = vmatpush1.xpose.msra.mxu0 0.0
        %622 = vmatprep.subr.mxu0 0.0
        %623 = vmatpush1.xpose.msra.mxu0 0.0
        %624 = vmatprep.subr.mxu0 0.0
        %625 = vmatpush1.xpose.msra.mxu0 0.0
        %626 = vmatprep.subr.mxu0 0.0
        %627 = vmatpush1.xpose.msra.mxu0 0.0
        %628 = vmatprep.subr.mxu0 0.0
        %629 = vmatpush1.xpose.msra.mxu0 0.0
        %630 = vmatprep.subr.mxu0 0.0
        %631 = vmatpush1.xpose.msra.mxu0 0.0
        %632 = vmatprep.subr.mxu0 0.0
        %633 = vmatpush1.xpose.msra.mxu0 0.0
        %634 = vmatprep.subr.mxu0 0.0
        %635 = vmatpush1.xpose.msra.mxu0 0.0
        %636 = vmatprep.subr.mxu0 0.0
        %637 = vmatpush1.xpose.msra.mxu0 0.0
        %638 = vmatprep.mubr.f32.mxu0 0.0
        %639 = vmatmul.mubr.f32.gmra.mrb[0].mxu0 %v479
        %v640 = vpop.f32.mrb[0].mxu0
        %v641 = vadd.f32 %v400, %v640
        %v642 = vpop.f32.mrb[0].mxu0
        %643 = vmatprep.mubr.f32.mxu0 0.0
        %644 = vmatmul.mubr.f32.gmra.mrb[0].mxu0 %v482
        %v645 = vpop.f32.mrb[0].mxu0
        %v646 = vadd.f32 %v405, %v645
        %v647 = vpop.f32.mrb[0].mxu0
        %648 = vmatprep.mubr.f32.mxu0 0.0
        %649 = vmatmul.mubr.f32.gmra.mrb[0].mxu0 %v485
        %v650 = vpop.f32.mrb[0].mxu0
        %v651 = vadd.f32 %v410, %v650
        %v652 = vpop.f32.mrb[0].mxu0
        %653 = vmatprep.mubr.f32.mxu0 0.0
        %654 = vmatmul.mubr.f32.gmra.mrb[0].mxu0 %v488
        %v655 = vpop.f32.mrb[0].mxu0
        %v656 = vadd.f32 %v415, %v655
        %v657 = vpop.f32.mrb[0].mxu0
        %658 = vmatprep.mubr.f32.mxu0 0.0
        %659 = vmatmul.mubr.f32.gmra.mrb[0].mxu0 %v491
        %v660 = vpop.f32.mrb[0].mxu0
        %v661 = vadd.f32 %v420, %v660
        %v662 = vpop.f32.mrb[0].mxu0
        %663 = vmatprep.mubr.f32.mxu0 0.0
        %664 = vmatmul.mubr.f32.gmra.mrb[0].mxu0 %v494
        %v665 = vpop.f32.mrb[0].mxu0
        %v666 = vadd.f32 %v425, %v665
        %v667 = vpop.f32.mrb[0].mxu0
        %668 = vmatprep.mubr.f32.mxu0 0.0
        %669 = vmatmul.mubr.f32.gmra.mrb[0].mxu0 %v497
        %v670 = vpop.f32.mrb[0].mxu0
        %v671 = vadd.f32 %v430, %v670
        %v672 = vpop.f32.mrb[0].mxu0
        %673 = vmatprep.mubr.f32.mxu0 0.0
        %674 = vmatmul.mubr.f32.gmra.mrb[0].mxu0 %v500
        %v675 = vpop.f32.mrb[0].mxu0
        %v676 = vadd.f32 %v435, %v675
        %v677 = vpop.f32.mrb[0].mxu0
        %678 = vmatprep.mubr.f32.mxu0 0.0
        %679 = vmatmul.mubr.f32.gmra.mrb[0].mxu0 %v503
        %v680 = vpop.f32.mrb[0].mxu0
        %v681 = vadd.f32 %v440, %v680
        %v682 = vpop.f32.mrb[0].mxu0
        %683 = vmatprep.mubr.f32.mxu0 0.0
        %684 = vmatmul.mubr.f32.gmra.mrb[0].mxu0 %v506
        %v685 = vpop.f32.mrb[0].mxu0
        %v686 = vadd.f32 %v445, %v685
        %v687 = vpop.f32.mrb[0].mxu0
        %688 = vmatprep.mubr.f32.mxu0 0.0
        %689 = vmatmul.mubr.f32.gmra.mrb[0].mxu0 %v509
        %v690 = vpop.f32.mrb[0].mxu0
        %v691 = vadd.f32 %v450, %v690
        %v692 = vpop.f32.mrb[0].mxu0
        %693 = vmatprep.mubr.f32.mxu0 0.0
        %694 = vmatmul.mubr.f32.gmra.mrb[0].mxu0 %v512
        %v695 = vpop.f32.mrb[0].mxu0
        %v696 = vadd.f32 %v455, %v695
        %v697 = vpop.f32.mrb[0].mxu0
        %698 = vmatprep.mubr.f32.mxu0 0.0
        %699 = vmatmul.mubr.f32.gmra.mrb[0].mxu0 %v515
        %v700 = vpop.f32.mrb[0].mxu0
        %v701 = vadd.f32 %v460, %v700
        %v702 = vpop.f32.mrb[0].mxu0
        %703 = vmatprep.mubr.f32.mxu0 0.0
        %704 = vmatmul.mubr.f32.gmra.mrb[0].mxu0 %v518
        %v705 = vpop.f32.mrb[0].mxu0
        %v706 = vadd.f32 %v465, %v705
        %v707 = vpop.f32.mrb[0].mxu0
        %708 = vmatprep.mubr.f32.mxu0 0.0
        %709 = vmatmul.mubr.f32.gmra.mrb[0].mxu0 %v521
        %v710 = vpop.f32.mrb[0].mxu0
        %v711 = vadd.f32 %v470, %v710
        %v712 = vpop.f32.mrb[0].mxu0
        %713 = vmatprep.mubr.f32.mxu0 0.0
        %714 = vmatmul.mubr.f32.gmra.mrb[0].mxu0 %v524
        %v715 = vpop.f32.mrb[0].mxu0
        %v716 = vadd.f32 %v475, %v715
        %v717 = vpop.f32.mrb[0].mxu0
        %718 = vdwg.mxu0
        %v719 = vld [vmem:[%s331] sm:$0x1]
        %v721 = vlaneseq
        %v722 = vshrl.u32 %v721, 7
        %v723 = vsub.s32 0, %v722
        %v724 = vrot.slane %v719, %v723
        %v726 = vadd.f32 %v641, %v724
        %v727 = vadd.f32 %v646, %v724
        %v728 = vadd.f32 %v651, %v724
        %v729 = vadd.f32 %v656, %v724
        %v730 = vadd.f32 %v661, %v724
        %v731 = vadd.f32 %v666, %v724
        %v732 = vadd.f32 %v671, %v724
        %v733 = vadd.f32 %v676, %v724
        %v734 = vadd.f32 %v681, %v724
        %v735 = vadd.f32 %v686, %v724
        %v736 = vadd.f32 %v691, %v724
        %v737 = vadd.f32 %v696, %v724
        %v738 = vadd.f32 %v701, %v724
        %v739 = vadd.f32 %v706, %v724
        %v740 = vadd.f32 %v711, %v724
        %v741 = vadd.f32 %v716, %v724
        %742 = vst [vmem:[%s295] sm:$0xff] %v726
        %743 = vst [vmem:[%s295 + $0x8] sm:$0xff] %v727
        %744 = vst [vmem:[%s295 + $0x10] sm:$0xff] %v728
        %745 = vst [vmem:[%s295 + $0x18] sm:$0xff] %v729
        %746 = vst [vmem:[%s295 + $0x20] sm:$0xff] %v730
        %747 = vst [vmem:[%s295 + $0x28] sm:$0xff] %v731
        %748 = vst [vmem:[%s295 + $0x30] sm:$0xff] %v732
        %749 = vst [vmem:[%s295 + $0x38] sm:$0xff] %v733
        %750 = vst [vmem:[%s295 + $0x40] sm:$0xff] %v734
        %751 = vst [vmem:[%s295 + $0x48] sm:$0xff] %v735
        %752 = vst [vmem:[%s295 + $0x50] sm:$0xff] %v736
        %753 = vst [vmem:[%s295 + $0x58] sm:$0xff] %v737
        %754 = vst [vmem:[%s295 + $0x60] sm:$0xff] %v738
        %755 = vst [vmem:[%s295 + $0x68] sm:$0xff] %v739
        %756 = vst [vmem:[%s295 + $0x70] sm:$0xff] %v740
        %757 = vst [vmem:[%s295 + $0x78] sm:$0xff] %v741
        %s758 = sand.u32 %s161, 1
        %s759 = scalar_lea.sflag [#allocation3], %s758
        %s760 = sand.u32 %s161, 1
        %s761 = smul.addr %s760, 128
        %s762 = scalar_lea.vmem [#allocation2], %s761
        // Predicated region
        $region37: #{tpu_custom_call.1} parent=35 // pred_check
          %p763 = pneg %p171
        $region38: #{tpu_custom_call.1} parent=35 // pred_check_branch
          %765 = sbr.rel (%p763) target = $region40
        $region39: #{tpu_custom_call.1} parent=35 // pred_region
          %s766 = smul.u32 16, %s24
          %s768 = ssub.s32 2048, 2048
          %769 = vsyncadd %s759, %s768
          %s770 = sadd.s32 %s25, %s766
          %s771 = smul.addr %s23, 16
          %s772 = sadd.s32 %s770, %s771
          %s773 = smul.addr %s772, 128
          %s774 = scalar_lea.hbm %s4, %s773
          %s775 = sshll.u32 %s762, 4
          %s776 = int_to_ptr.vmem [resolvable:$true] %s775
          %781 = dma.vmem_to_hbm [thread:$0]  %s776, 2048, %s774, %s759, 128, 128, 8
        $region40: #{tpu_custom_call.1} parent=35 // pred_fallthru
          _
      $region36: #{tpu_custom_call.1} parent=5 // pred_fallthru
        _
      %p782 = scmp.le.s32.totalorder 2, %s13
      // Predicated region
      $region41: #{tpu_custom_call.1} parent=5 // pred_check
        %p783 = pneg %p782
      $region42: #{tpu_custom_call.1} parent=5 // pred_check_branch
        %785 = sbr.rel (%p783) target = $region44
      $region43: #{tpu_custom_call.1} parent=5 // pred_region
        %s786 = ssub.s32 %s13, 2
        // Predicated region
        $region45: #{tpu_custom_call.1} parent=43 // pred_check
          %p787 = pneg %p177
        $region46: #{tpu_custom_call.1} parent=43 // pred_check_branch
          %789 = sbr.rel (%p787) target = $region48
        $region47: #{tpu_custom_call.1} parent=43 // pred_region
          %s790 = sand.u32 %s162, 1
          %s791 = scalar_lea.sflag [#allocation3], %s790
          %s792 = sand.u32 %s162, 1
          %s793 = smul.addr %s792, 128
          %s794 = scalar_lea.vmem [#allocation2], %s793
          %795 = dma.done %s791, 2048
        $region48: #{tpu_custom_call.1} parent=43 // pred_fallthru
          _
      $region44: #{tpu_custom_call.1} parent=5 // pred_fallthru
        _
    $region6: #{tpu_custom_call.1} parent=1 // loop_footer
      %s17 = sadd.s32 1, %s13
    $region7: #{tpu_custom_call.1} parent=1 // loop_footer_branch
      %12 = sbr.rel target = $region3
    $region8: #{tpu_custom_call.1} parent=1 // loop_exit
      _
    %796 = vsyncpa [#allocation3], 1
    %s797 = scalar_lea.sflag [#allocation3], 1
    %798 = vsyncpa %s797, 1

</llo_original>
